<compile_context>
chip_gen: v7x
topology: tpu7x:2x2x1
jax: 0.10.0
libtpu: 0.0.40
codegen_flags: <defaults>
</compile_context>

<pallas_src>
import jax
import jax.numpy as jnp
from jax.experimental import pallas as pl
from jax.experimental.pallas import tpu as pltpu


# high-precision f32 matmul helper (used for the one-time collapse + reference)
def _hdot(a, b):
    return jnp.dot(a, b, precision=jax.lax.Precision.HIGHEST)


# ----------------------------------------------------------------------------
# Pallas kernel: fused (stand-in BERT projection) + collapsed FC head.
#
#   logits = pooled @ Pw + Pb                                     [TB, 768]
#   out    = logits @ W_eff + num_excl * w_excl + b_eff           [TB, 128]
#
# Numerically identical to the module's
#   cat(logits, num_excl) -> fc1 -> dropout -> fc2 -> dropout -> fc3
# with dropout == identity in eval and the affine chain pre-collapsed.
# Output columns [class_num:128] are exact zeros (zero-padded weights/bias).
# ----------------------------------------------------------------------------
def head_kernel(pooled_ref, excl_ref, pw_ref, pb_ref,
                w_eff_ref, w_excl_ref, b_eff_ref, o_ref):
    pooled = pooled_ref[...]                                         # [TB, H]
    logits = jnp.dot(pooled, pw_ref[...],
                     preferred_element_type=jnp.float32) + pb_ref[...]   # [TB, 768]
    out = jnp.dot(logits, w_eff_ref[...],
                  preferred_element_type=jnp.float32)                    # [TB, 128]
    # rank-1 exclamation term (replaces the K=769 concat) + collapsed bias
    out = out + excl_ref[...] * w_excl_ref[...] + b_eff_ref[...]
    o_ref[...] = out.astype(o_ref.dtype)


def fused_head(pooled, num_excl, pw, pb, w_eff, w_excl, b_eff, *, class_num):
    B, H = pooled.shape
    E = pw.shape[1]          # 768
    N = w_eff.shape[1]       # 128 (lane-padded class dim)

    # Pad batch to a sublane multiple; tile it so large B shards across cores.
    TB = 128 if B >= 128 else 8
    B_pad = ((B + TB - 1) // TB) * TB
    if B_pad != B:
        pooled = jnp.pad(pooled, ((0, B_pad - B), (0, 0)))
        num_excl = jnp.pad(num_excl, ((0, B_pad - B),))
    excl_col = num_excl[:, None]                                      # [B_pad, 1]

    grid = (B_pad // TB,)
    const = lambda i: (0, 0)   # weights: same block every grid step (VMEM-resident)

    flops = 2 * B_pad * (H * E + E * N)
    bytes_accessed = 4 * (pooled.size + excl_col.size + pw.size + pb.size
                          + w_eff.size + w_excl.size + b_eff.size + B_pad * N)

    out = pl.pallas_call(
        head_kernel,
        out_shape=jax.ShapeDtypeStruct((B_pad, N), jnp.float32),
        grid=grid,
        in_specs=[
            pl.BlockSpec((TB, H), lambda i: (i, 0)),   # pooled
            pl.BlockSpec((TB, 1), lambda i: (i, 0)),   # num_excl column
            pl.BlockSpec((H, E), const),               # bert_proj_w
            pl.BlockSpec((1, E), const),               # bert_proj_b
            pl.BlockSpec((E, N), const),               # collapsed W_eff (logits rows)
            pl.BlockSpec((1, N), const),               # collapsed W_eff (excl row)
            pl.BlockSpec((1, N), const),               # collapsed bias
        ],
        out_specs=pl.BlockSpec((TB, N), lambda i: (i, 0)),
        compiler_params=pltpu.CompilerParams(
            dimension_semantics=("parallel",)),
        cost_estimate=pl.CostEstimate(flops=flops, transcendentals=0,
                                      bytes_accessed=bytes_accessed),
    )(pooled, excl_col, pw, pb, w_eff, w_excl, b_eff)

    return out[:B, :class_num]


# ----------------------------------------------------------------------------
# One-time parameter prep: collapse fc1 -> fc2 -> fc3 and pad to lane width.
# ----------------------------------------------------------------------------
def prepare_head(params, *, class_num, n_pad=128):
    w1, b1 = params["fc1_w"], params["fc1_b"]      # [769, 385], [1, 385]
    w2, b2 = params["fc2_w"], params["fc2_b"]      # [385, 192], [1, 192]
    w3, b3 = params["fc3_w"], params["fc3_b"]      # [192, C],   [1, C]
    w123 = _hdot(_hdot(w1, w2), w3)                # [769, C]
    b_eff = _hdot(_hdot(b1, w2) + b2, w3) + b3     # [1, C]
    pad = ((0, 0), (0, n_pad - class_num))         # lane-dense output padding
    return {
        "bert_proj_w": params["bert_proj_w"],                      # [H, 768]
        "bert_proj_b": params["bert_proj_b"].reshape(1, -1),       # [1, 768]
        "w_eff": jnp.pad(w123[:-1], pad),                          # [768, 128]
        "w_excl": jnp.pad(w123[-1:], pad),                         # [1, 128]
        "b_eff": jnp.pad(b_eff, pad),                              # [1, 128]
    }


# ----------------------------------------------------------------------------
# Full forward: synthetic BERT stand-in (glue JAX) + fused Pallas head.
# ----------------------------------------------------------------------------
def bert_fc_with_exclamation_forward(params, head, x_ids, num_excl, *, class_num):
    # TODO(synk): real pretrained BertForSequenceClassification (num_labels=768)
    # has no in-script Pallas equivalent; replaced by embedding + mean pool here,
    # with the projection-to-768 fused into the Pallas kernel.
    emb = params["embed_table"][x_ids]              # [B, S, H]
    pooled = jnp.mean(emb, axis=1)                  # [B, H]
    return fused_head(pooled, num_excl,
                      head["bert_proj_w"], head["bert_proj_b"],
                      head["w_eff"], head["w_excl"], head["b_eff"],
                      class_num=class_num)


def init_params(key, vocab_size, seq_hidden, embed_dim, class_num):
    ks = jax.random.split(key, 8)
    d1 = embed_dim + 1
    d2 = embed_dim // 2 + 1
    d3 = embed_dim // 4

    def lin(k, fan_in, fan_out):
        bound = 1.0 / jnp.sqrt(fan_in)
        kw, kb = jax.random.split(k)
        w = jax.random.uniform(kw, (fan_in, fan_out), jnp.float32, -bound, bound)
        b = jax.random.uniform(kb, (1, fan_out), jnp.float32, -bound, bound)
        return w, b

    fc1_w, fc1_b = lin(ks[0], d1, d2)
    fc2_w, fc2_b = lin(ks[1], d2, d3)
    fc3_w, fc3_b = lin(ks[2], d3, class_num)

    return {
        "embed_table": jax.random.normal(ks[3], (vocab_size, seq_hidden), jnp.float32) * 0.02,
        "bert_proj_w": jax.random.normal(ks[4], (seq_hidden, embed_dim), jnp.float32) * 0.02,
        "bert_proj_b": jnp.zeros((embed_dim,), jnp.float32),
        "fc1_w": fc1_w, "fc1_b": fc1_b,
        "fc2_w": fc2_w, "fc2_b": fc2_b,
        "fc3_w": fc3_w, "fc3_b": fc3_b,
    }


if __name__ == "__main__":
    # Small example shapes consistent with the module:
    #   embed_dim = 768 (BERT num_labels=768 concatenated with num_excl),
    #   batch=2, seq=8, class_num=4, stand-in hidden=32, vocab=100.
    B, S = 2, 8
    VOCAB, HIDDEN = 100, 32
    EMBED_DIM, CLASS_NUM = 768, 4

    key = jax.random.PRNGKey(0)
    k_param, k_ids, k_excl = jax.random.split(key, 3)

    params = init_params(k_param, VOCAB, HIDDEN, EMBED_DIM, CLASS_NUM)
    head = prepare_head(params, class_num=CLASS_NUM)

    x_ids = jax.random.randint(k_ids, (B, S), 0, VOCAB, dtype=jnp.int32)
    num_excl = jax.random.randint(k_excl, (B,), 0, 10).astype(jnp.float32)

    out = bert_fc_with_exclamation_forward(params, head, x_ids, num_excl,
                                           class_num=CLASS_NUM)
    out = jax.block_until_ready(out)

    # Reference: the module's original (un-collapsed) sequential path in plain JAX.
    emb = params["embed_table"][x_ids]
    pooled = jnp.mean(emb, axis=1)
    logits = _hdot(pooled, params["bert_proj_w"]) + params["bert_proj_b"]
    x_cat = jnp.concatenate([logits, num_excl[:, None]], axis=1)
    ref = _hdot(x_cat, params["fc1_w"]) + params["fc1_b"]
    ref = _hdot(ref, params["fc2_w"]) + params["fc2_b"]
    ref = _hdot(ref, params["fc3_w"]) + params["fc3_b"]

    assert out.shape == (B, CLASS_NUM), out.shape
    # Tolerance covers reassociation of the (mathematically exact) affine collapse
    # and MXU-vs-XLA f32 accumulation-order differences.
    assert jnp.allclose(out, ref, atol=5e-4, rtol=5e-3), "mismatch vs reference"

    print("KERNEL_OK")
</pallas_src>

<mosaic_0001>
module attributes {stable_mosaic.version = 11 : i64} {
  func.func @head_kernel(%arg0: i32, %arg1: memref<8x32xf32, #tpu.memory_space<vmem>>, %arg2: memref<8x1xf32, #tpu.memory_space<vmem>>, %arg3: memref<32x768xf32, #tpu.memory_space<vmem>>, %arg4: memref<1x768xf32, #tpu.memory_space<vmem>>, %arg5: memref<768x128xf32, #tpu.memory_space<vmem>>, %arg6: memref<1x128xf32, #tpu.memory_space<vmem>>, %arg7: memref<1x128xf32, #tpu.memory_space<vmem>>, %arg8: memref<8x128xf32, #tpu.memory_space<vmem>>) attributes {dimension_semantics = [#tpu.dimension_semantics<parallel>], iteration_bounds = array<i64: 1>, scalar_prefetch = 0 : i64, scratch_operands = 0 : i64, tpu.core_type = #tpu.core_type<tc>, window_params = [{transform_indices = @transform_0, window_bounds = array<i64: 8, 32>}, {transform_indices = @transform_1, window_bounds = array<i64: 8, 1>}, {pipeline_mode = #tpu.pipeline_mode<synchronous>, transform_indices = @transform_2, window_bounds = array<i64: 32, 768>}, {pipeline_mode = #tpu.pipeline_mode<synchronous>, transform_indices = @transform_3, window_bounds = array<i64: 1, 768>}, {pipeline_mode = #tpu.pipeline_mode<synchronous>, transform_indices = @transform_4, window_bounds = array<i64: 768, 128>}, {pipeline_mode = #tpu.pipeline_mode<synchronous>, transform_indices = @transform_5, window_bounds = array<i64: 1, 128>}, {pipeline_mode = #tpu.pipeline_mode<synchronous>, transform_indices = @transform_6, window_bounds = array<i64: 1, 128>}, {transform_indices = @transform_7, window_bounds = array<i64: 8, 128>}]} {
    %c0 = arith.constant 0 : index
    %c0_0 = arith.constant 0 : index
    %0 = vector.load %arg1[%c0, %c0_0] : memref<8x32xf32, #tpu.memory_space<vmem>>, vector<8x32xf32>
    %c0_1 = arith.constant 0 : index
    %c0_2 = arith.constant 0 : index
    %1 = vector.load %arg3[%c0_1, %c0_2] : memref<32x768xf32, #tpu.memory_space<vmem>>, vector<32x768xf32>
    %cst = arith.constant dense<0.000000e+00> : vector<8x768xf32>
    %2 = tpu.matmul %0, %1, %cst {dimension_numbers = #tpu.dot_dimension_numbers<[1], [0], [0], [1], [0, 0, 1, 1], [], []>} : vector<8x32xf32>, vector<32x768xf32>, vector<8x768xf32> -> vector<8x768xf32>
    %c0_3 = arith.constant 0 : index
    %c0_4 = arith.constant 0 : index
    %3 = vector.load %arg4[%c0_3, %c0_4] : memref<1x768xf32, #tpu.memory_space<vmem>>, vector<1x768xf32>
    %4 = vector.broadcast %3 : vector<1x768xf32> to vector<8x768xf32>
    %5 = arith.addf %2, %4 : vector<8x768xf32>
    %c0_5 = arith.constant 0 : index
    %c0_6 = arith.constant 0 : index
    %6 = vector.load %arg5[%c0_5, %c0_6] : memref<768x128xf32, #tpu.memory_space<vmem>>, vector<768x128xf32>
    %cst_7 = arith.constant dense<0.000000e+00> : vector<8x128xf32>
    %7 = tpu.matmul %5, %6, %cst_7 {dimension_numbers = #tpu.dot_dimension_numbers<[1], [0], [0], [1], [0, 0, 1, 1], [], []>} : vector<8x768xf32>, vector<768x128xf32>, vector<8x128xf32> -> vector<8x128xf32>
    %c0_8 = arith.constant 0 : index
    %c0_9 = arith.constant 0 : index
    %8 = vector.load %arg2[%c0_8, %c0_9] : memref<8x1xf32, #tpu.memory_space<vmem>>, vector<8x1xf32>
    %c0_10 = arith.constant 0 : index
    %c0_11 = arith.constant 0 : index
    %9 = vector.load %arg6[%c0_10, %c0_11] : memref<1x128xf32, #tpu.memory_space<vmem>>, vector<1x128xf32>
    %10 = vector.broadcast %8 : vector<8x1xf32> to vector<8x128xf32>
    %11 = vector.broadcast %9 : vector<1x128xf32> to vector<8x128xf32>
    %12 = arith.mulf %10, %11 : vector<8x128xf32>
    %13 = arith.addf %7, %12 : vector<8x128xf32>
    %c0_12 = arith.constant 0 : index
    %c0_13 = arith.constant 0 : index
    %14 = vector.load %arg7[%c0_12, %c0_13] : memref<1x128xf32, #tpu.memory_space<vmem>>, vector<1x128xf32>
    %15 = vector.broadcast %14 : vector<1x128xf32> to vector<8x128xf32>
    %16 = arith.addf %13, %15 : vector<8x128xf32>
    %c0_14 = arith.constant 0 : index
    %c0_15 = arith.constant 0 : index
    %17 = vector.load %arg8[%c0_14, %c0_15] : memref<8x128xf32, #tpu.memory_space<vmem>>, vector<8x128xf32>
    tpu.vector_store %arg8[%c0_14, %c0_15], %16 {strides = array<i32>} : memref<8x128xf32, #tpu.memory_space<vmem>>, vector<8x128xf32>,
    return
  }
  func.func @transform_0(%arg0: i32) -> (i32, i32) {
    %c0_i32 = arith.constant 0 : i32
    %c0_i32_0 = arith.constant 0 : i32
    return %arg0, %c0_i32 : i32, i32
  }
  func.func @transform_1(%arg0: i32) -> (i32, i32) {
    %c0_i32 = arith.constant 0 : i32
    %c0_i32_0 = arith.constant 0 : i32
    return %arg0, %c0_i32 : i32, i32
  }
  func.func @transform_2(%arg0: i32) -> (i32, i32) {
    %c0_i32 = arith.constant 0 : i32
    %c0_i32_0 = arith.constant 0 : i32
    %c0_i32_1 = arith.constant 0 : i32
    return %c0_i32, %c0_i32_0 : i32, i32
  }
  func.func @transform_3(%arg0: i32) -> (i32, i32) {
    %c0_i32 = arith.constant 0 : i32
    %c0_i32_0 = arith.constant 0 : i32
    %c0_i32_1 = arith.constant 0 : i32
    return %c0_i32, %c0_i32_0 : i32, i32
  }
  func.func @transform_4(%arg0: i32) -> (i32, i32) {
    %c0_i32 = arith.constant 0 : i32
    %c0_i32_0 = arith.constant 0 : i32
    %c0_i32_1 = arith.constant 0 : i32
    return %c0_i32, %c0_i32_0 : i32, i32
  }
  func.func @transform_5(%arg0: i32) -> (i32, i32) {
    %c0_i32 = arith.constant 0 : i32
    %c0_i32_0 = arith.constant 0 : i32
    %c0_i32_1 = arith.constant 0 : i32
    return %c0_i32, %c0_i32_0 : i32, i32
  }
  func.func @transform_6(%arg0: i32) -> (i32, i32) {
    %c0_i32 = arith.constant 0 : i32
    %c0_i32_0 = arith.constant 0 : i32
    %c0_i32_1 = arith.constant 0 : i32
    return %c0_i32, %c0_i32_0 : i32, i32
  }
  func.func @transform_7(%arg0: i32) -> (i32, i32) {
    %c0_i32 = arith.constant 0 : i32
    %c0_i32_0 = arith.constant 0 : i32
    return %arg0, %c0_i32 : i32, i32
  }
}

</mosaic_0001>

<llo_original>
// kernel: tpu_custom_call.1
$region0: #{tpu_custom_call.1}
  #allocation0 [shape = 'u32[]', space=smem, size = 0x4, offset = 0x4, fixed_abs, tag = 'smem constant byte address 0x4 - core index']
  #allocation1 [shape = 'u32[144,128]{1,0:T(1,128)}', space=vmem, size = 0x12000, scoped, tag = 'internal scratch']
  %s0 = inlined_call_operand.vmem [shape: f32[8,32], index: 0, kind: input, shape index: {}]
  %s1 = inlined_call_operand.vmem [shape: f32[8,1], index: 1, kind: input, shape index: {}]
  %s2 = inlined_call_operand.hbm [shape: f32[32,768], index: 2, kind: input, shape index: {}]
  %s3 = inlined_call_operand.vmem [shape: f32[1,768], index: 3, kind: input, shape index: {}]
  %s4 = inlined_call_operand.hbm [shape: f32[768,128], index: 4, kind: input, shape index: {}]
  %s5 = inlined_call_operand.vmem [shape: f32[1,128], index: 5, kind: input, shape index: {}]
  %s6 = inlined_call_operand.vmem [shape: f32[1,128], index: 6, kind: input, shape index: {}]
  %s7 = inlined_call_operand.hbm [shape: f32[8,128], index: 7, kind: output, shape index: {}]
  %s8 = sld [smem:[#allocation0]]
  $region46: #{tpu_custom_call.1} parent=0
    _
  %s10 = ssub.s32 1, %s8
  %s11 = scalar_select 0, %s10, %s8
  $region1: #{tpu_custom_call.1} parent=0
    #allocation2 [shape = 'u8[98304]{0}', space=vmem, size = 0x18000, scoped, tag = 'input window, operand 2, single buffered']
    #allocation3 [shape = 's32[1]{0}', space=sflag, size = 0x4, scoped, tag = 'scoped memory for tpu_custom_call.1']
    #allocation4 [shape = 's32[1]{0}', space=sflag, size = 0x4, scoped, tag = 'scoped memory for tpu_custom_call.1']
    #allocation5 [shape = 'u8[393216]{0}', space=vmem, size = 0x60000, scoped, tag = 'input window, operand 4, single buffered']
    #allocation6 [shape = 's32[1]{0}', space=sflag, size = 0x4, scoped, tag = 'scoped memory for tpu_custom_call.1']
    #allocation7 [shape = 'u8[4096]{0}', space=vmem, size = 0x1000, scoped, tag = 'output window, operand 0, single buffered']
    %12 = vsyncpa [#allocation3], 0
    %13 = vsyncpa [#allocation6], 0
    %14 = vsyncpa [#allocation4], 0
    // Predicated region
    $region2: #{tpu_custom_call.1} parent=1 // pred_check
      _
    $region3: #{tpu_custom_call.1} parent=1 // pred_check_branch
      %16 = sbr.rel (0) target = $region5
    $region4: #{tpu_custom_call.1} parent=1 // pred_region
      _
    $region5: #{tpu_custom_call.1} parent=1 // pred_fallthru
      _
    // Predicated region
    $region6: #{tpu_custom_call.1} parent=1 // pred_check
      _
    $region7: #{tpu_custom_call.1} parent=1 // pred_check_branch
      %18 = sbr.rel (0) target = $region9
    $region8: #{tpu_custom_call.1} parent=1 // pred_region
      _
    $region9: #{tpu_custom_call.1} parent=1 // pred_fallthru
      _
    // Predicated region
    $region10: #{tpu_custom_call.1} parent=1 // pred_check
      _
    $region11: #{tpu_custom_call.1} parent=1 // pred_check_branch
      %20 = sbr.rel (0) target = $region13
    $region12: #{tpu_custom_call.1} parent=1 // pred_region
      %s22 = ssub.s32 3072, 3072
      %23 = vsyncadd [#allocation3], %s22
      %s24 = sshll.u32 [#allocation2], 4
      %s25 = int_to_ptr.vmem [resolvable:$true] %s24
      %30 = dma.hbm_to_vmem [thread:$0]  %s2, 3072, %s25, [#allocation3], 768, 768, 48
    $region13: #{tpu_custom_call.1} parent=1 // pred_fallthru
      _
    // Predicated region
    $region14: #{tpu_custom_call.1} parent=1 // pred_check
      _
    $region15: #{tpu_custom_call.1} parent=1 // pred_check_branch
      %32 = sbr.rel (0) target = $region17
    $region16: #{tpu_custom_call.1} parent=1 // pred_region
      _
    $region17: #{tpu_custom_call.1} parent=1 // pred_fallthru
      _
    // Predicated region
    $region18: #{tpu_custom_call.1} parent=1 // pred_check
      _
    $region19: #{tpu_custom_call.1} parent=1 // pred_check_branch
      %34 = sbr.rel (0) target = $region21
    $region20: #{tpu_custom_call.1} parent=1 // pred_region
      %s36 = ssub.s32 12288, 12288
      %37 = vsyncadd [#allocation6], %s36
      %s38 = sshll.u32 [#allocation5], 4
      %s39 = int_to_ptr.vmem [resolvable:$true] %s38
      %44 = dma.hbm_to_vmem [thread:$0]  %s4, 12288, %s39, [#allocation6], 128, 128, 8
    $region21: #{tpu_custom_call.1} parent=1 // pred_fallthru
      _
    // Predicated region
    $region22: #{tpu_custom_call.1} parent=1 // pred_check
      _
    $region23: #{tpu_custom_call.1} parent=1 // pred_check_branch
      %46 = sbr.rel (0) target = $region25
    $region24: #{tpu_custom_call.1} parent=1 // pred_region
      _
    $region25: #{tpu_custom_call.1} parent=1 // pred_fallthru
      _
    // Predicated region
    $region26: #{tpu_custom_call.1} parent=1 // pred_check
      _
    $region27: #{tpu_custom_call.1} parent=1 // pred_check_branch
      %48 = sbr.rel (0) target = $region29
    $region28: #{tpu_custom_call.1} parent=1 // pred_region
      _
    $region29: #{tpu_custom_call.1} parent=1 // pred_fallthru
      _
    // Predicated region
    $region30: #{tpu_custom_call.1} parent=1 // pred_check
      _
    $region31: #{tpu_custom_call.1} parent=1 // pred_check_branch
      %50 = sbr.rel (0) target = $region33
    $region32: #{tpu_custom_call.1} parent=1 // pred_region
      %51 = dma.done [#allocation3], 3072
    $region33: #{tpu_custom_call.1} parent=1 // pred_fallthru
      _
    // Predicated region
    $region34: #{tpu_custom_call.1} parent=1 // pred_check
      _
    $region35: #{tpu_custom_call.1} parent=1 // pred_check_branch
      %53 = sbr.rel (0) target = $region37
    $region36: #{tpu_custom_call.1} parent=1 // pred_region
      %54 = dma.done [#allocation6], 12288
    $region37: #{tpu_custom_call.1} parent=1 // pred_fallthru
      _
    %v55 = vld [vmem:[%s0] sm:$0xff]
    %v56 = vld [vmem:[#allocation2] sm:$0xff]
    %v57 = vld [vmem:[#allocation2 + $0x8] sm:$0xff]
    %v58 = vld [vmem:[#allocation2 + $0x10] sm:$0xff]
    %v59 = vld [vmem:[#allocation2 + $0x18] sm:$0xff]
    %v60 = vld [vmem:[#allocation2 + $0x20] sm:$0xff]
    %v61 = vld [vmem:[#allocation2 + $0x28] sm:$0xff]
    %v62 = vld [vmem:[#allocation2 + $0x30] sm:$0xff]
    %v63 = vld [vmem:[#allocation2 + $0x38] sm:$0xff]
    %v64 = vld [vmem:[#allocation2 + $0x40] sm:$0xff]
    %v65 = vld [vmem:[#allocation2 + $0x48] sm:$0xff]
    %v66 = vld [vmem:[#allocation2 + $0x50] sm:$0xff]
    %v67 = vld [vmem:[#allocation2 + $0x58] sm:$0xff]
    %v68 = vld [vmem:[#allocation2 + $0x60] sm:$0xff]
    %v69 = vld [vmem:[#allocation2 + $0x68] sm:$0xff]
    %v70 = vld [vmem:[#allocation2 + $0x70] sm:$0xff]
    %v71 = vld [vmem:[#allocation2 + $0x78] sm:$0xff]
    %v72 = vld [vmem:[#allocation2 + $0x80] sm:$0xff]
    %v73 = vld [vmem:[#allocation2 + $0x88] sm:$0xff]
    %v74 = vld [vmem:[#allocation2 + $0x90] sm:$0xff]
    %v75 = vld [vmem:[#allocation2 + $0x98] sm:$0xff]
    %v76 = vld [vmem:[#allocation2 + $0xa0] sm:$0xff]
    %v77 = vld [vmem:[#allocation2 + $0xa8] sm:$0xff]
    %v78 = vld [vmem:[#allocation2 + $0xb0] sm:$0xff]
    %v79 = vld [vmem:[#allocation2 + $0xb8] sm:$0xff]
    %v80 = vld [vmem:[%s3] sm:$0x3f]
    %v82 = vlaneseq
    %v83 = vshrl.u32 %v82, 7
    %v84 = vsub.s32 0, %v83
    %v85 = vrot.slane %v80, %v84
    %v86 = vlaneseq
    %v87 = vshrl.u32 %v86, 7
    %v88 = vsub.s32 1, %v87
    %v89 = vrot.slane %v80, %v88
    %v90 = vlaneseq
    %v91 = vshrl.u32 %v90, 7
    %v92 = vsub.s32 2, %v91
    %v93 = vrot.slane %v80, %v92
    %v94 = vlaneseq
    %v95 = vshrl.u32 %v94, 7
    %v96 = vsub.s32 3, %v95
    %v97 = vrot.slane %v80, %v96
    %v98 = vlaneseq
    %v99 = vshrl.u32 %v98, 7
    %v100 = vsub.s32 4, %v99
    %v101 = vrot.slane %v80, %v100
    %v102 = vlaneseq
    %v103 = vshrl.u32 %v102, 7
    %v104 = vsub.s32 5, %v103
    %v105 = vrot.slane %v80, %v104
    %vm112 = vcmask 261120
    %v114 = vsel %vm112, %v55, 0
    %116 = vmatprep.subr.mxu0 %v57
    %117 = vmatpush1.msra.mxu0 %v56
    %118 = vmatprep.subr.mxu0 %v63
    %119 = vmatpush1.msra.mxu0 %v62
    %120 = vmatprep.subr.mxu0 %v69
    %121 = vmatpush1.msra.mxu0 %v68
    %122 = vmatprep.subr.mxu0 %v75
    %123 = vmatpush1.msra.mxu0 %v74
    %124 = vmatprep.subr.mxu0 0.0
    %125 = vmatpush1.msra.mxu0 0.0
    %126 = vmatprep.subr.mxu0 0.0
    %127 = vmatpush1.msra.mxu0 0.0
    %128 = vmatprep.subr.mxu0 0.0
    %129 = vmatpush1.msra.mxu0 0.0
    %130 = vmatprep.subr.mxu0 0.0
    %131 = vmatpush1.msra.mxu0 0.0
    %132 = vmatprep.subr.mxu0 0.0
    %133 = vmatpush1.msra.mxu0 0.0
    %134 = vmatprep.subr.mxu0 0.0
    %135 = vmatpush1.msra.mxu0 0.0
    %136 = vmatprep.subr.mxu0 0.0
    %137 = vmatpush1.msra.mxu0 0.0
    %138 = vmatprep.subr.mxu0 0.0
    %139 = vmatpush1.msra.mxu0 0.0
    %140 = vmatprep.subr.mxu0 0.0
    %141 = vmatpush1.msra.mxu0 0.0
    %142 = vmatprep.subr.mxu0 0.0
    %143 = vmatpush1.msra.mxu0 0.0
    %144 = vmatprep.subr.mxu0 0.0
    %145 = vmatpush1.msra.mxu0 0.0
    %146 = vmatprep.subr.mxu0 0.0
    %147 = vmatpush1.msra.mxu0 0.0
    %148 = vmatprep.subr.mxu0 0.0
    %149 = vmatpush1.msra.mxu0 0.0
    %150 = vmatprep.subr.mxu0 0.0
    %151 = vmatpush1.msra.mxu0 0.0
    %152 = vmatprep.subr.mxu0 0.0
    %153 = vmatpush1.msra.mxu0 0.0
    %154 = vmatprep.subr.mxu0 0.0
    %155 = vmatpush1.msra.mxu0 0.0
    %156 = vmatprep.subr.mxu0 0.0
    %157 = vmatpush1.msra.mxu0 0.0
    %158 = vmatprep.subr.mxu0 0.0
    %159 = vmatpush1.msra.mxu0 0.0
    %160 = vmatprep.subr.mxu0 0.0
    %161 = vmatpush1.msra.mxu0 0.0
    %162 = vmatprep.subr.mxu0 0.0
    %163 = vmatpush1.msra.mxu0 0.0
    %164 = vmatprep.subr.mxu0 0.0
    %165 = vmatpush1.msra.mxu0 0.0
    %166 = vmatprep.subr.mxu0 0.0
    %167 = vmatpush1.msra.mxu0 0.0
    %168 = vmatprep.subr.mxu0 0.0
    %169 = vmatpush1.msra.mxu0 0.0
    %170 = vmatprep.subr.mxu0 0.0
    %171 = vmatpush1.msra.mxu0 0.0
    %172 = vmatprep.subr.mxu0 0.0
    %173 = vmatpush1.msra.mxu0 0.0
    %174 = vmatprep.subr.mxu0 0.0
    %175 = vmatpush1.msra.mxu0 0.0
    %176 = vmatprep.subr.mxu0 0.0
    %177 = vmatpush1.msra.mxu0 0.0
    %178 = vmatprep.subr.mxu0 0.0
    %179 = vmatpush1.msra.mxu0 0.0
    %180 = vmatprep.mubr.f32.mxu0 0.0
    %181 = vmatmul.mubr.f32.gmra.mrb[0].mxu0 %v114
    %v182 = vpop.f32.mrb[0].mxu0
    %v183 = vadd.f32 %v85, %v182
    %v184 = vpop.f32.mrb[0].mxu0
    %v185 = vadd.f32 %v89, %v184
    %186 = vdwg.mxu0
    %187 = vmatprep.subr.mxu0 %v59
    %188 = vmatpush1.msra.mxu0 %v58
    %189 = vmatprep.subr.mxu0 %v65
    %190 = vmatpush1.msra.mxu0 %v64
    %191 = vmatprep.subr.mxu0 %v71
    %192 = vmatpush1.msra.mxu0 %v70
    %193 = vmatprep.subr.mxu0 %v77
    %194 = vmatpush1.msra.mxu0 %v76
    %195 = vmatprep.subr.mxu0 0.0
    %196 = vmatpush1.msra.mxu0 0.0
    %197 = vmatprep.subr.mxu0 0.0
    %198 = vmatpush1.msra.mxu0 0.0
    %199 = vmatprep.subr.mxu0 0.0
    %200 = vmatpush1.msra.mxu0 0.0
    %201 = vmatprep.subr.mxu0 0.0
    %202 = vmatpush1.msra.mxu0 0.0
    %203 = vmatprep.subr.mxu0 0.0
    %204 = vmatpush1.msra.mxu0 0.0
    %205 = vmatprep.subr.mxu0 0.0
    %206 = vmatpush1.msra.mxu0 0.0
    %207 = vmatprep.subr.mxu0 0.0
    %208 = vmatpush1.msra.mxu0 0.0
    %209 = vmatprep.subr.mxu0 0.0
    %210 = vmatpush1.msra.mxu0 0.0
    %211 = vmatprep.subr.mxu0 0.0
    %212 = vmatpush1.msra.mxu0 0.0
    %213 = vmatprep.subr.mxu0 0.0
    %214 = vmatpush1.msra.mxu0 0.0
    %215 = vmatprep.subr.mxu0 0.0
    %216 = vmatpush1.msra.mxu0 0.0
    %217 = vmatprep.subr.mxu0 0.0
    %218 = vmatpush1.msra.mxu0 0.0
    %219 = vmatprep.subr.mxu0 0.0
    %220 = vmatpush1.msra.mxu0 0.0
    %221 = vmatprep.subr.mxu0 0.0
    %222 = vmatpush1.msra.mxu0 0.0
    %223 = vmatprep.subr.mxu0 0.0
    %224 = vmatpush1.msra.mxu0 0.0
    %225 = vmatprep.subr.mxu0 0.0
    %226 = vmatpush1.msra.mxu0 0.0
    %227 = vmatprep.subr.mxu0 0.0
    %228 = vmatpush1.msra.mxu0 0.0
    %229 = vmatprep.subr.mxu0 0.0
    %230 = vmatpush1.msra.mxu0 0.0
    %231 = vmatprep.subr.mxu0 0.0
    %232 = vmatpush1.msra.mxu0 0.0
    %233 = vmatprep.subr.mxu0 0.0
    %234 = vmatpush1.msra.mxu0 0.0
    %235 = vmatprep.subr.mxu0 0.0
    %236 = vmatpush1.msra.mxu0 0.0
    %237 = vmatprep.subr.mxu0 0.0
    %238 = vmatpush1.msra.mxu0 0.0
    %239 = vmatprep.subr.mxu0 0.0
    %240 = vmatpush1.msra.mxu0 0.0
    %241 = vmatprep.subr.mxu0 0.0
    %242 = vmatpush1.msra.mxu0 0.0
    %243 = vmatprep.subr.mxu0 0.0
    %244 = vmatpush1.msra.mxu0 0.0
    %245 = vmatprep.subr.mxu0 0.0
    %246 = vmatpush1.msra.mxu0 0.0
    %247 = vmatprep.subr.mxu0 0.0
    %248 = vmatpush1.msra.mxu0 0.0
    %249 = vmatprep.subr.mxu0 0.0
    %250 = vmatpush1.msra.mxu0 0.0
    %251 = vmatprep.mubr.f32.mxu0 0.0
    %252 = vmatmul.mubr.f32.gmra.mrb[0].mxu0 %v114
    %v253 = vpop.f32.mrb[0].mxu0
    %v254 = vadd.f32 %v93, %v253
    %v255 = vpop.f32.mrb[0].mxu0
    %v256 = vadd.f32 %v97, %v255
    %257 = vdwg.mxu0
    %258 = vmatprep.subr.mxu0 %v61
    %259 = vmatpush1.msra.mxu0 %v60
    %260 = vmatprep.subr.mxu0 %v67
    %261 = vmatpush1.msra.mxu0 %v66
    %262 = vmatprep.subr.mxu0 %v73
    %263 = vmatpush1.msra.mxu0 %v72
    %264 = vmatprep.subr.mxu0 %v79
    %265 = vmatpush1.msra.mxu0 %v78
    %266 = vmatprep.subr.mxu0 0.0
    %267 = vmatpush1.msra.mxu0 0.0
    %268 = vmatprep.subr.mxu0 0.0
    %269 = vmatpush1.msra.mxu0 0.0
    %270 = vmatprep.subr.mxu0 0.0
    %271 = vmatpush1.msra.mxu0 0.0
    %272 = vmatprep.subr.mxu0 0.0
    %273 = vmatpush1.msra.mxu0 0.0
    %274 = vmatprep.subr.mxu0 0.0
    %275 = vmatpush1.msra.mxu0 0.0
    %276 = vmatprep.subr.mxu0 0.0
    %277 = vmatpush1.msra.mxu0 0.0
    %278 = vmatprep.subr.mxu0 0.0
    %279 = vmatpush1.msra.mxu0 0.0
    %280 = vmatprep.subr.mxu0 0.0
    %281 = vmatpush1.msra.mxu0 0.0
    %282 = vmatprep.subr.mxu0 0.0
    %283 = vmatpush1.msra.mxu0 0.0
    %284 = vmatprep.subr.mxu0 0.0
    %285 = vmatpush1.msra.mxu0 0.0
    %286 = vmatprep.subr.mxu0 0.0
    %287 = vmatpush1.msra.mxu0 0.0
    %288 = vmatprep.subr.mxu0 0.0
    %289 = vmatpush1.msra.mxu0 0.0
    %290 = vmatprep.subr.mxu0 0.0
    %291 = vmatpush1.msra.mxu0 0.0
    %292 = vmatprep.subr.mxu0 0.0
    %293 = vmatpush1.msra.mxu0 0.0
    %294 = vmatprep.subr.mxu0 0.0
    %295 = vmatpush1.msra.mxu0 0.0
    %296 = vmatprep.subr.mxu0 0.0
    %297 = vmatpush1.msra.mxu0 0.0
    %298 = vmatprep.subr.mxu0 0.0
    %299 = vmatpush1.msra.mxu0 0.0
    %300 = vmatprep.subr.mxu0 0.0
    %301 = vmatpush1.msra.mxu0 0.0
    %302 = vmatprep.subr.mxu0 0.0
    %303 = vmatpush1.msra.mxu0 0.0
    %304 = vmatprep.subr.mxu0 0.0
    %305 = vmatpush1.msra.mxu0 0.0
    %306 = vmatprep.subr.mxu0 0.0
    %307 = vmatpush1.msra.mxu0 0.0
    %308 = vmatprep.subr.mxu0 0.0
    %309 = vmatpush1.msra.mxu0 0.0
    %310 = vmatprep.subr.mxu0 0.0
    %311 = vmatpush1.msra.mxu0 0.0
    %312 = vmatprep.subr.mxu0 0.0
    %313 = vmatpush1.msra.mxu0 0.0
    %314 = vmatprep.subr.mxu0 0.0
    %315 = vmatpush1.msra.mxu0 0.0
    %316 = vmatprep.subr.mxu0 0.0
    %317 = vmatpush1.msra.mxu0 0.0
    %318 = vmatprep.subr.mxu0 0.0
    %319 = vmatpush1.msra.mxu0 0.0
    %320 = vmatprep.subr.mxu0 0.0
    %321 = vmatpush1.msra.mxu0 0.0
    %322 = vmatprep.mubr.f32.mxu0 0.0
    %323 = vmatmul.mubr.f32.gmra.mrb[0].mxu0 %v114
    %v324 = vpop.f32.mrb[0].mxu0
    %v325 = vadd.f32 %v101, %v324
    %v326 = vpop.f32.mrb[0].mxu0
    %v327 = vadd.f32 %v105, %v326
    %328 = vdwg.mxu0
    %v329 = vld [vmem:[#allocation5] sm:$0xff]
    %v330 = vld [vmem:[#allocation5 + $0x8] sm:$0xff]
    %v331 = vld [vmem:[#allocation5 + $0x10] sm:$0xff]
    %v332 = vld [vmem:[#allocation5 + $0x18] sm:$0xff]
    %v333 = vld [vmem:[#allocation5 + $0x20] sm:$0xff]
    %v334 = vld [vmem:[#allocation5 + $0x28] sm:$0xff]
    %v335 = vld [vmem:[#allocation5 + $0x30] sm:$0xff]
    %v336 = vld [vmem:[#allocation5 + $0x38] sm:$0xff]
    %v337 = vld [vmem:[#allocation5 + $0x40] sm:$0xff]
    %v338 = vld [vmem:[#allocation5 + $0x48] sm:$0xff]
    %v339 = vld [vmem:[#allocation5 + $0x50] sm:$0xff]
    %v340 = vld [vmem:[#allocation5 + $0x58] sm:$0xff]
    %v341 = vld [vmem:[#allocation5 + $0x60] sm:$0xff]
    %v342 = vld [vmem:[#allocation5 + $0x68] sm:$0xff]
    %v343 = vld [vmem:[#allocation5 + $0x70] sm:$0xff]
    %v344 = vld [vmem:[#allocation5 + $0x78] sm:$0xff]
    %v345 = vld [vmem:[#allocation5 + $0x80] sm:$0xff]
    %v346 = vld [vmem:[#allocation5 + $0x88] sm:$0xff]
    %v347 = vld [vmem:[#allocation5 + $0x90] sm:$0xff]
    %v348 = vld [vmem:[#allocation5 + $0x98] sm:$0xff]
    %v349 = vld [vmem:[#allocation5 + $0xa0] sm:$0xff]
    %v350 = vld [vmem:[#allocation5 + $0xa8] sm:$0xff]
    %v351 = vld [vmem:[#allocation5 + $0xb0] sm:$0xff]
    %v352 = vld [vmem:[#allocation5 + $0xb8] sm:$0xff]
    %v353 = vld [vmem:[#allocation5 + $0xc0] sm:$0xff]
    %v354 = vld [vmem:[#allocation5 + $0xc8] sm:$0xff]
    %v355 = vld [vmem:[#allocation5 + $0xd0] sm:$0xff]
    %v356 = vld [vmem:[#allocation5 + $0xd8] sm:$0xff]
    %v357 = vld [vmem:[#allocation5 + $0xe0] sm:$0xff]
    %v358 = vld [vmem:[#allocation5 + $0xe8] sm:$0xff]
    %v359 = vld [vmem:[#allocation5 + $0xf0] sm:$0xff]
    %v360 = vld [vmem:[#allocation5 + $0xf8] sm:$0xff]
    %v361 = vld [vmem:[#allocation5 + $0x100] sm:$0xff]
    %v362 = vld [vmem:[#allocation5 + $0x108] sm:$0xff]
    %v363 = vld [vmem:[#allocation5 + $0x110] sm:$0xff]
    %v364 = vld [vmem:[#allocation5 + $0x118] sm:$0xff]
    %v365 = vld [vmem:[#allocation5 + $0x120] sm:$0xff]
    %v366 = vld [vmem:[#allocation5 + $0x128] sm:$0xff]
    %v367 = vld [vmem:[#allocation5 + $0x130] sm:$0xff]
    %v368 = vld [vmem:[#allocation5 + $0x138] sm:$0xff]
    %v369 = vld [vmem:[#allocation5 + $0x140] sm:$0xff]
    %v370 = vld [vmem:[#allocation5 + $0x148] sm:$0xff]
    %v371 = vld [vmem:[#allocation5 + $0x150] sm:$0xff]
    %v372 = vld [vmem:[#allocation5 + $0x158] sm:$0xff]
    %v373 = vld [vmem:[#allocation5 + $0x160] sm:$0xff]
    %v374 = vld [vmem:[#allocation5 + $0x168] sm:$0xff]
    %v375 = vld [vmem:[#allocation5 + $0x170] sm:$0xff]
    %v376 = vld [vmem:[#allocation5 + $0x178] sm:$0xff]
    %v377 = vld [vmem:[#allocation5 + $0x180] sm:$0xff]
    %v378 = vld [vmem:[#allocation5 + $0x188] sm:$0xff]
    %v379 = vld [vmem:[#allocation5 + $0x190] sm:$0xff]
    %v380 = vld [vmem:[#allocation5 + $0x198] sm:$0xff]
    %v381 = vld [vmem:[#allocation5 + $0x1a0] sm:$0xff]
    %v382 = vld [vmem:[#allocation5 + $0x1a8] sm:$0xff]
    %v383 = vld [vmem:[#allocation5 + $0x1b0] sm:$0xff]
    %v384 = vld [vmem:[#allocation5 + $0x1b8] sm:$0xff]
    %v385 = vld [vmem:[#allocation5 + $0x1c0] sm:$0xff]
    %v386 = vld [vmem:[#allocation5 + $0x1c8] sm:$0xff]
    %v387 = vld [vmem:[#allocation5 + $0x1d0] sm:$0xff]
    %v388 = vld [vmem:[#allocation5 + $0x1d8] sm:$0xff]
    %v389 = vld [vmem:[#allocation5 + $0x1e0] sm:$0xff]
    %v390 = vld [vmem:[#allocation5 + $0x1e8] sm:$0xff]
    %v391 = vld [vmem:[#allocation5 + $0x1f0] sm:$0xff]
    %v392 = vld [vmem:[#allocation5 + $0x1f8] sm:$0xff]
    %v393 = vld [vmem:[#allocation5 + $0x200] sm:$0xff]
    %v394 = vld [vmem:[#allocation5 + $0x208] sm:$0xff]
    %v395 = vld [vmem:[#allocation5 + $0x210] sm:$0xff]
    %v396 = vld [vmem:[#allocation5 + $0x218] sm:$0xff]
    %v397 = vld [vmem:[#allocation5 + $0x220] sm:$0xff]
    %v398 = vld [vmem:[#allocation5 + $0x228] sm:$0xff]
    %v399 = vld [vmem:[#allocation5 + $0x230] sm:$0xff]
    %v400 = vld [vmem:[#allocation5 + $0x238] sm:$0xff]
    %v401 = vld [vmem:[#allocation5 + $0x240] sm:$0xff]
    %v402 = vld [vmem:[#allocation5 + $0x248] sm:$0xff]
    %v403 = vld [vmem:[#allocation5 + $0x250] sm:$0xff]
    %v404 = vld [vmem:[#allocation5 + $0x258] sm:$0xff]
    %v405 = vld [vmem:[#allocation5 + $0x260] sm:$0xff]
    %v406 = vld [vmem:[#allocation5 + $0x268] sm:$0xff]
    %v407 = vld [vmem:[#allocation5 + $0x270] sm:$0xff]
    %v408 = vld [vmem:[#allocation5 + $0x278] sm:$0xff]
    %v409 = vld [vmem:[#allocation5 + $0x280] sm:$0xff]
    %v410 = vld [vmem:[#allocation5 + $0x288] sm:$0xff]
    %v411 = vld [vmem:[#allocation5 + $0x290] sm:$0xff]
    %v412 = vld [vmem:[#allocation5 + $0x298] sm:$0xff]
    %v413 = vld [vmem:[#allocation5 + $0x2a0] sm:$0xff]
    %v414 = vld [vmem:[#allocation5 + $0x2a8] sm:$0xff]
    %v415 = vld [vmem:[#allocation5 + $0x2b0] sm:$0xff]
    %v416 = vld [vmem:[#allocation5 + $0x2b8] sm:$0xff]
    %v417 = vld [vmem:[#allocation5 + $0x2c0] sm:$0xff]
    %v418 = vld [vmem:[#allocation5 + $0x2c8] sm:$0xff]
    %v419 = vld [vmem:[#allocation5 + $0x2d0] sm:$0xff]
    %v420 = vld [vmem:[#allocation5 + $0x2d8] sm:$0xff]
    %v421 = vld [vmem:[#allocation5 + $0x2e0] sm:$0xff]
    %v422 = vld [vmem:[#allocation5 + $0x2e8] sm:$0xff]
    %v423 = vld [vmem:[#allocation5 + $0x2f0] sm:$0xff]
    %v424 = vld [vmem:[#allocation5 + $0x2f8] sm:$0xff]
    %v425 = vld [vmem:[%s1] sm:$0xff]
    %v426 = vld [vmem:[%s5] sm:$0x1]
    %428 = vset.pattern.permute.xlu0 0
    %429 = vperm.xlu0 %428, %v425
    %v430 = vpop.permute.xlu0 %429
    %v433 = vlaneseq
    %v434 = vshrl.u32 %v433, 7
    %v435 = vsub.s32 0, %v434
    %v436 = vrot.slane %v426, %v435
    %v438 = vmul.f32 %v430, %v436
    %439 = vmatprep.subr.mxu0 0.0
    %440 = vmatpush1.msra.mxu0 %v329
    %441 = vmatprep.subr.mxu0 0.0
    %442 = vmatpush1.msra.mxu0 %v330
    %443 = vmatprep.subr.mxu0 0.0
    %444 = vmatpush1.msra.mxu0 %v331
    %445 = vmatprep.subr.mxu0 0.0
    %446 = vmatpush1.msra.mxu0 %v332
    %447 = vmatprep.subr.mxu0 0.0
    %448 = vmatpush1.msra.mxu0 %v333
    %449 = vmatprep.subr.mxu0 0.0
    %450 = vmatpush1.msra.mxu0 %v334
    %451 = vmatprep.subr.mxu0 0.0
    %452 = vmatpush1.msra.mxu0 %v335
    %453 = vmatprep.subr.mxu0 0.0
    %454 = vmatpush1.msra.mxu0 %v336
    %455 = vmatprep.subr.mxu0 0.0
    %456 = vmatpush1.msra.mxu0 %v337
    %457 = vmatprep.subr.mxu0 0.0
    %458 = vmatpush1.msra.mxu0 %v338
    %459 = vmatprep.subr.mxu0 0.0
    %460 = vmatpush1.msra.mxu0 %v339
    %461 = vmatprep.subr.mxu0 0.0
    %462 = vmatpush1.msra.mxu0 %v340
    %463 = vmatprep.subr.mxu0 0.0
    %464 = vmatpush1.msra.mxu0 %v341
    %465 = vmatprep.subr.mxu0 0.0
    %466 = vmatpush1.msra.mxu0 %v342
    %467 = vmatprep.subr.mxu0 0.0
    %468 = vmatpush1.msra.mxu0 %v343
    %469 = vmatprep.subr.mxu0 0.0
    %470 = vmatpush1.msra.mxu0 %v344
    %471 = vmatprep.subr.mxu0 0.0
    %472 = vmatpush1.msra.mxu0 %v345
    %473 = vmatprep.subr.mxu0 0.0
    %474 = vmatpush1.msra.mxu0 %v346
    %475 = vmatprep.subr.mxu0 0.0
    %476 = vmatpush1.msra.mxu0 %v347
    %477 = vmatprep.subr.mxu0 0.0
    %478 = vmatpush1.msra.mxu0 %v348
    %479 = vmatprep.subr.mxu0 0.0
    %480 = vmatpush1.msra.mxu0 %v349
    %481 = vmatprep.subr.mxu0 0.0
    %482 = vmatpush1.msra.mxu0 %v350
    %483 = vmatprep.subr.mxu0 0.0
    %484 = vmatpush1.msra.mxu0 %v351
    %485 = vmatprep.subr.mxu0 0.0
    %486 = vmatpush1.msra.mxu0 %v352
    %487 = vmatprep.subr.mxu0 0.0
    %488 = vmatpush1.msra.mxu0 %v353
    %489 = vmatprep.subr.mxu0 0.0
    %490 = vmatpush1.msra.mxu0 %v354
    %491 = vmatprep.subr.mxu0 0.0
    %492 = vmatpush1.msra.mxu0 %v355
    %493 = vmatprep.subr.mxu0 0.0
    %494 = vmatpush1.msra.mxu0 %v356
    %495 = vmatprep.subr.mxu0 0.0
    %496 = vmatpush1.msra.mxu0 %v357
    %497 = vmatprep.subr.mxu0 0.0
    %498 = vmatpush1.msra.mxu0 %v358
    %499 = vmatprep.subr.mxu0 0.0
    %500 = vmatpush1.msra.mxu0 %v359
    %501 = vmatprep.subr.mxu0 0.0
    %502 = vmatpush1.msra.mxu0 %v360
    %503 = vmatprep.mubr.f32.mxu0 %v185
    %504 = vmatmul.mubr.f32.gmra.mrb[0].mxu0 %v183
    %v505 = vpop.f32.mrb[0].mxu0
    %v506 = vadd.f32 %v438, %v505
    %v507 = vpop.f32.mrb[0].mxu0
    %508 = vdwg.mxu0
    %509 = vmatprep.subr.mxu0 0.0
    %510 = vmatpush1.msra.mxu0 %v361
    %511 = vmatprep.subr.mxu0 0.0
    %512 = vmatpush1.msra.mxu0 %v362
    %513 = vmatprep.subr.mxu0 0.0
    %514 = vmatpush1.msra.mxu0 %v363
    %515 = vmatprep.subr.mxu0 0.0
    %516 = vmatpush1.msra.mxu0 %v364
    %517 = vmatprep.subr.mxu0 0.0
    %518 = vmatpush1.msra.mxu0 %v365
    %519 = vmatprep.subr.mxu0 0.0
    %520 = vmatpush1.msra.mxu0 %v366
    %521 = vmatprep.subr.mxu0 0.0
    %522 = vmatpush1.msra.mxu0 %v367
    %523 = vmatprep.subr.mxu0 0.0
    %524 = vmatpush1.msra.mxu0 %v368
    %525 = vmatprep.subr.mxu0 0.0
    %526 = vmatpush1.msra.mxu0 %v369
    %527 = vmatprep.subr.mxu0 0.0
    %528 = vmatpush1.msra.mxu0 %v370
    %529 = vmatprep.subr.mxu0 0.0
    %530 = vmatpush1.msra.mxu0 %v371
    %531 = vmatprep.subr.mxu0 0.0
    %532 = vmatpush1.msra.mxu0 %v372
    %533 = vmatprep.subr.mxu0 0.0
    %534 = vmatpush1.msra.mxu0 %v373
    %535 = vmatprep.subr.mxu0 0.0
    %536 = vmatpush1.msra.mxu0 %v374
    %537 = vmatprep.subr.mxu0 0.0
    %538 = vmatpush1.msra.mxu0 %v375
    %539 = vmatprep.subr.mxu0 0.0
    %540 = vmatpush1.msra.mxu0 %v376
    %541 = vmatprep.subr.mxu0 0.0
    %542 = vmatpush1.msra.mxu0 %v377
    %543 = vmatprep.subr.mxu0 0.0
    %544 = vmatpush1.msra.mxu0 %v378
    %545 = vmatprep.subr.mxu0 0.0
    %546 = vmatpush1.msra.mxu0 %v379
    %547 = vmatprep.subr.mxu0 0.0
    %548 = vmatpush1.msra.mxu0 %v380
    %549 = vmatprep.subr.mxu0 0.0
    %550 = vmatpush1.msra.mxu0 %v381
    %551 = vmatprep.subr.mxu0 0.0
    %552 = vmatpush1.msra.mxu0 %v382
    %553 = vmatprep.subr.mxu0 0.0
    %554 = vmatpush1.msra.mxu0 %v383
    %555 = vmatprep.subr.mxu0 0.0
    %556 = vmatpush1.msra.mxu0 %v384
    %557 = vmatprep.subr.mxu0 0.0
    %558 = vmatpush1.msra.mxu0 %v385
    %559 = vmatprep.subr.mxu0 0.0
    %560 = vmatpush1.msra.mxu0 %v386
    %561 = vmatprep.subr.mxu0 0.0
    %562 = vmatpush1.msra.mxu0 %v387
    %563 = vmatprep.subr.mxu0 0.0
    %564 = vmatpush1.msra.mxu0 %v388
    %565 = vmatprep.subr.mxu0 0.0
    %566 = vmatpush1.msra.mxu0 %v389
    %567 = vmatprep.subr.mxu0 0.0
    %568 = vmatpush1.msra.mxu0 %v390
    %569 = vmatprep.subr.mxu0 0.0
    %570 = vmatpush1.msra.mxu0 %v391
    %571 = vmatprep.subr.mxu0 0.0
    %572 = vmatpush1.msra.mxu0 %v392
    %573 = vmatprep.mubr.f32.mxu0 %v256
    %574 = vmatmul.mubr.f32.gmra.mrb[0].mxu0 %v254
    %v575 = vpop.f32.mrb[0].mxu0
    %v576 = vadd.f32 %v506, %v575
    %v577 = vpop.f32.mrb[0].mxu0
    %578 = vdwg.mxu0
    %579 = vmatprep.subr.mxu0 0.0
    %580 = vmatpush1.msra.mxu0 %v393
    %581 = vmatprep.subr.mxu0 0.0
    %582 = vmatpush1.msra.mxu0 %v394
    %583 = vmatprep.subr.mxu0 0.0
    %584 = vmatpush1.msra.mxu0 %v395
    %585 = vmatprep.subr.mxu0 0.0
    %586 = vmatpush1.msra.mxu0 %v396
    %587 = vmatprep.subr.mxu0 0.0
    %588 = vmatpush1.msra.mxu0 %v397
    %589 = vmatprep.subr.mxu0 0.0
    %590 = vmatpush1.msra.mxu0 %v398
    %591 = vmatprep.subr.mxu0 0.0
    %592 = vmatpush1.msra.mxu0 %v399
    %593 = vmatprep.subr.mxu0 0.0
    %594 = vmatpush1.msra.mxu0 %v400
    %595 = vmatprep.subr.mxu0 0.0
    %596 = vmatpush1.msra.mxu0 %v401
    %597 = vmatprep.subr.mxu0 0.0
    %598 = vmatpush1.msra.mxu0 %v402
    %599 = vmatprep.subr.mxu0 0.0
    %600 = vmatpush1.msra.mxu0 %v403
    %601 = vmatprep.subr.mxu0 0.0
    %602 = vmatpush1.msra.mxu0 %v404
    %603 = vmatprep.subr.mxu0 0.0
    %604 = vmatpush1.msra.mxu0 %v405
    %605 = vmatprep.subr.mxu0 0.0
    %606 = vmatpush1.msra.mxu0 %v406
    %607 = vmatprep.subr.mxu0 0.0
    %608 = vmatpush1.msra.mxu0 %v407
    %609 = vmatprep.subr.mxu0 0.0
    %610 = vmatpush1.msra.mxu0 %v408
    %611 = vmatprep.subr.mxu0 0.0
    %612 = vmatpush1.msra.mxu0 %v409
    %613 = vmatprep.subr.mxu0 0.0
    %614 = vmatpush1.msra.mxu0 %v410
    %615 = vmatprep.subr.mxu0 0.0
    %616 = vmatpush1.msra.mxu0 %v411
    %617 = vmatprep.subr.mxu0 0.0
    %618 = vmatpush1.msra.mxu0 %v412
    %619 = vmatprep.subr.mxu0 0.0
    %620 = vmatpush1.msra.mxu0 %v413
    %621 = vmatprep.subr.mxu0 0.0
    %622 = vmatpush1.msra.mxu0 %v414
    %623 = vmatprep.subr.mxu0 0.0
    %624 = vmatpush1.msra.mxu0 %v415
    %625 = vmatprep.subr.mxu0 0.0
    %626 = vmatpush1.msra.mxu0 %v416
    %627 = vmatprep.subr.mxu0 0.0
    %628 = vmatpush1.msra.mxu0 %v417
    %629 = vmatprep.subr.mxu0 0.0
    %630 = vmatpush1.msra.mxu0 %v418
    %631 = vmatprep.subr.mxu0 0.0
    %632 = vmatpush1.msra.mxu0 %v419
    %633 = vmatprep.subr.mxu0 0.0
    %634 = vmatpush1.msra.mxu0 %v420
    %635 = vmatprep.subr.mxu0 0.0
    %636 = vmatpush1.msra.mxu0 %v421
    %637 = vmatprep.subr.mxu0 0.0
    %638 = vmatpush1.msra.mxu0 %v422
    %639 = vmatprep.subr.mxu0 0.0
    %640 = vmatpush1.msra.mxu0 %v423
    %641 = vmatprep.subr.mxu0 0.0
    %642 = vmatpush1.msra.mxu0 %v424
    %643 = vmatprep.mubr.f32.mxu0 %v327
    %644 = vmatmul.mubr.f32.gmra.mrb[0].mxu0 %v325
    %v645 = vpop.f32.mrb[0].mxu0
    %v646 = vadd.f32 %v576, %v645
    %v647 = vpop.f32.mrb[0].mxu0
    %648 = vdwg.mxu0
    %v649 = vld [vmem:[%s6] sm:$0x1]
    %v651 = vlaneseq
    %v652 = vshrl.u32 %v651, 7
    %v653 = vsub.s32 0, %v652
    %v654 = vrot.slane %v649, %v653
    %v656 = vadd.f32 %v646, %v654
    %657 = vst [vmem:[#allocation7] sm:$0xff] %v656
    // Predicated region
    $region38: #{tpu_custom_call.1} parent=1 // pred_check
      _
    $region39: #{tpu_custom_call.1} parent=1 // pred_check_branch
      %659 = sbr.rel (0) target = $region41
    $region40: #{tpu_custom_call.1} parent=1 // pred_region
      %s661 = ssub.s32 128, 128
      %662 = vsyncadd [#allocation4], %s661
      %s664 = sshll.u32 [#allocation7], 4
      %s665 = int_to_ptr.vmem [resolvable:$true] %s664
      %667 = dma.vmem_to_hbm [thread:$0]  %s665, 128, %s7, [#allocation4]
    $region41: #{tpu_custom_call.1} parent=1 // pred_fallthru
      _
    // Predicated region
    $region42: #{tpu_custom_call.1} parent=1 // pred_check
      _
    $region43: #{tpu_custom_call.1} parent=1 // pred_check_branch
      %669 = sbr.rel (0) target = $region45
    $region44: #{tpu_custom_call.1} parent=1 // pred_region
      %670 = dma.done [#allocation4], 128
    $region45: #{tpu_custom_call.1} parent=1 // pred_fallthru
      _
    %671 = vsyncpa [#allocation3], 1
    %672 = vsyncpa [#allocation6], 1
    %673 = vsyncpa [#allocation4], 1

</llo_original>
